<compile_context>
chip_gen: v7x
topology: tpu7x:2x2x1
jax: 0.10.0
libtpu: 0.0.40
codegen_flags: <defaults>
</compile_context>

<pallas_src>
import functools
import math

import jax
import jax.numpy as jnp
from jax import lax
from jax.experimental import pallas as pl
from jax.experimental.pallas import tpu as pltpu


# ----------------------------------------------------------------------------
# Kernel 1: nearest-neighbor 2x upsample as a single lane-dense matmul.
# (with_conv=False path)
# ----------------------------------------------------------------------------
def _upsample2x_kernel(x_ref, g_ref, o_ref):
    # x_ref: (TB, Kin) row-groups of the input (Kin = half_k*W >= 128 when possible).
    # g_ref: (Kin, 4*Kin) constant 0/1 duplication matrix (constant block -> fetched once).
    # o_ref: (TB, 4*Kin) -> exactly 2*half_k upsampled output rows per kernel row.
    # Kernel is HBM-bound; the tiny-K matmul rides the otherwise-idle MXU.
    o_ref[...] = jnp.dot(
        x_ref[...], g_ref[...], preferred_element_type=jnp.float32
    ).astype(o_ref.dtype)


def upsample_nearest2x(x, *, target_block_bytes=8 * 1024 * 1024):
    """2x nearest-neighbor upsample of NCHW `x` (== F.interpolate(x, 2x, 'nearest'))."""
    N, C, H, W = x.shape
    dtype = x.dtype
    # TODO(synk): integer dtypes need a non-MXU interleave path (no int MXU on v7x).
    assert jnp.issubdtype(dtype, jnp.floating), "upsample kernel supports float dtypes"
    M = N * C * H                       # flat input rows of width W

    # Grow half_k until the contraction width Kin = half_k*W reaches a full 128-lane
    # vreg (dense LHS loads, one native MXU K pass, 4*Kin-lane unmasked store stream).
    half_k = 1
    while (half_k * W < 128) and (M % (2 * half_k) == 0):
        half_k *= 2
    Kin = half_k * W                    # contraction width
    Lout = 4 * half_k * W               # output lane width (2*half_k rows of width 2W)
    R = M // half_k                     # number of row-groups

    x_view = x.reshape(R, Kin)          # free reshape (no transpose, no HBM copy)

    # Constant duplication matrix G (Kin, Lout):
    #   out_view[g, so*2W + xo] = x_view[g, (so//2)*W + xo//2]
    row = jnp.arange(Kin)
    col = jnp.arange(Lout)
    r_of_row = row // W
    j_of_row = row % W
    r_of_col = (col // (2 * W)) // 2
    j_of_col = (col % (2 * W)) // 2
    G = (
        (r_of_col[None, :] == r_of_row[:, None])
        & (j_of_col[None, :] == j_of_row[:, None])
    ).astype(dtype)

    # Row tile: big blocks (~8 MiB output) to amortize per-step overhead, but keep at
    # least ~4 grid steps so input/output DMA overlap and both TCs get work.
    itemsize = x.dtype.itemsize
    out_row_bytes = Lout * itemsize
    budget_rows = max(8, (target_block_bytes // out_row_bytes) // 8 * 8)
    if R <= 8:
        tb = R                                           # tiny input: one full block
    else:
        min_steps = 4
        split_rows = max(8, (pl.cdiv(R, min_steps) // 8) * 8)
        tb = min(budget_rows, split_rows, (R // 8) * 8)
    grid = (pl.cdiv(R, tb),)                             # ragged last tile is masked

    out_view = pl.pallas_call(
        _upsample2x_kernel,
        out_shape=jax.ShapeDtypeStruct((R, Lout), dtype),
        grid_spec=pltpu.PrefetchScalarGridSpec(
            num_scalar_prefetch=0,
            grid=grid,
            in_specs=[
                pl.BlockSpec((tb, Kin), lambda i: (i, 0)),
                # Constant block index -> fetched once, no per-step re-DMA.
                pl.BlockSpec((Kin, Lout), lambda i: (0, 0)),
            ],
            out_specs=pl.BlockSpec((tb, Lout), lambda i: (i, 0)),
        ),
        compiler_params=pltpu.CompilerParams(
            dimension_semantics=("parallel",),
            vmem_limit_bytes=48 * 1024 * 1024,
        ),
    )(x_view, G)

    # Free reshape back to NCHW of the upsampled tensor.
    return out_view.reshape(N, C, 2 * H, 2 * W)


# ----------------------------------------------------------------------------
# Kernel 2: FUSED nearest-2x upsample + 3x3 "same" conv (with_conv=True path).
#
# Math: out[co, yo, xo] = b[co] + sum_{ci,di,dj} w[co,ci,di,dj] * h_pad[ci, yo+di-1, xo+dj-1]
# with h[ci, yh, xh] = x[ci, yh//2, xh//2].  For a fixed output-row parity py the three
# di taps collapse onto only two source x rows, so per output row we do, for each of
# the two row parts a and each column tap dj:
#     acc += (Wfold[py,a,dj] @ x_row) @ S[dj]
# where Wfold is (Cout,Cin) (parity-folded taps) and S[dj] is a constant (W, 2W)
# 0/1 matrix that duplicates width, shifts by dj-1 and zero-pads -- both matmuls on
# the MXU, contraction over channels, no explicit h or padding anywhere.
# ----------------------------------------------------------------------------
def _fused_up_conv3x3_kernel(wfold_ref, s_ref, b_ref, x_ref, o_ref, *,
                             cout, h_in, w_in, toh):
    # wfold_ref: (12, Cout, Cin) f32, k = (py*2 + a)*3 + dj
    # s_ref:     (3, W, 2W)      f32  width duplicate+shift+pad matrices
    # b_ref:     (Cout, 1)       f32
    # x_ref:     (1, H, Cin, W)       one input image (NHCW view), resident per n
    # o_ref:     (1, Cout, toh*2W)    output-row tile, flattened spatial (lane-dense)
    r = pl.program_id(1)
    tih = toh // 2
    two_w = 2 * w_in

    rows = []
    for t in range(toh):                     # static unroll over output rows in tile
        py = t & 1                           # tile rows are parity-aligned (toh even)
        yi = r * tih + (t // 2)              # source input row of this output row
        acc = jnp.zeros((cout, two_w), jnp.float32)
        for a in range(2):                   # the two contributing input rows
            xr = yi + (a - 1 + py)
            inb = jnp.logical_and(xr >= 0, xr < h_in)
            xrow = x_ref[0, jnp.clip(xr, 0, h_in - 1)].astype(jnp.float32)
            xrow = xrow * inb.astype(jnp.float32)      # zero-pad rows at image border
            for dj in range(3):
                k = (py * 2 + a) * 3 + dj
                q = jnp.dot(wfold_ref[k], xrow,
                            preferred_element_type=jnp.float32)        # (Cout, W)
                acc = acc + jnp.dot(q, s_ref[dj],
                                    preferred_element_type=jnp.float32)  # (Cout, 2W)
        rows.append(acc)

    tile = jnp.concatenate(rows, axis=-1) + b_ref[...]   # (Cout, toh*2W), one dense store
    o_ref[0, :, :] = tile.astype(o_ref.dtype)


def upsample_conv3x3_fused(x, weight, bias):
    """Fused nearest-2x upsample + 3x3 stride-1 'same' conv on NCHW x."""
    N, Cin, H, W = x.shape
    Cout = weight.shape[0]
    assert weight.shape == (Cout, Cin, 3, 3)
    assert jnp.issubdtype(x.dtype, jnp.floating)
    HO, WO = 2 * H, 2 * W
    dtype = x.dtype

    # --- host-side constant prep (tiny) ---
    w = weight.astype(jnp.float32)
    # Row-parity folded taps: [py][a][dj] -> (Cout, Cin)
    w_pa = jnp.stack([
        jnp.stack([w[:, :, 0, :], w[:, :, 1, :] + w[:, :, 2, :]], axis=0),   # py = 0
        jnp.stack([w[:, :, 0, :] + w[:, :, 1, :], w[:, :, 2, :]], axis=0),   # py = 1
    ], axis=0)                                                 # (2, 2, Cout, Cin, 3[dj])
    wfold = jnp.transpose(w_pa, (0, 1, 4, 2, 3)).reshape(12, Cout, Cin)

    # S[dj][j, xo] = 1 iff 0 <= xo+dj-1 < 2W and (xo+dj-1)//2 == j
    j = jnp.arange(W)[:, None]
    m = jnp.arange(WO)[None, :]
    s_taps = []
    for dj in range(3):
        xh = m + dj - 1
        ok = (xh >= 0) & (xh < WO)
        s_taps.append(((j == jnp.where(ok, xh // 2, -1)) & ok).astype(jnp.float32))
    s_mat = jnp.stack(s_taps, axis=0)                          # (3, W, 2W)

    b2 = bias.astype(jnp.float32).reshape(Cout, 1)

    # Small-input transpose so a conv row read is a clean page-indexed (Cin, W) tile
    # (channels on the contraction dim). This touches only the pre-upsample tensor.
    x_t = jnp.transpose(x, (0, 2, 1, 3))                       # (N, H, Cin, W)

    # Output-row tile: even, >= ceil(128 / 2W) rows so the flattened store is
    # lane-dense (>= 128 lanes), and dividing 2H so blocks tile exactly.
    toh = max(2, -(-128 // WO))
    toh += toh % 2
    toh = min(toh, HO)
    while HO % toh:
        toh -= 2
    rt = HO // toh

    kernel = functools.partial(_fused_up_conv3x3_kernel,
                               cout=Cout, h_in=H, w_in=W, toh=toh)
    out_flat = pl.pallas_call(
        kernel,
        out_shape=jax.ShapeDtypeStruct((N, Cout, HO * WO), dtype),
        grid_spec=pltpu.PrefetchScalarGridSpec(
            num_scalar_prefetch=0,
            grid=(N, rt),
            in_specs=[
                pl.BlockSpec((12, Cout, Cin), lambda n, r: (0, 0, 0)),   # folded taps
                pl.BlockSpec((3, W, WO), lambda n, r: (0, 0, 0)),        # dup matrices
                pl.BlockSpec((Cout, 1), lambda n, r: (0, 0)),            # bias
                # Whole (small) input image per n; block index is constant across r,
                # so it is fetched once per image. TODO(synk): halo-DMA row tiles at
                # production resolutions to bound VMEM.
                pl.BlockSpec((1, H, Cin, W), lambda n, r: (n, 0, 0, 0)),
            ],
            out_specs=pl.BlockSpec((1, Cout, toh * WO), lambda n, r: (n, 0, r)),
        ),
        compiler_params=pltpu.CompilerParams(
            dimension_semantics=("parallel", "arbitrary"),
            vmem_limit_bytes=48 * 1024 * 1024,
        ),
    )(wfold, s_mat, b2, x_t)

    return out_flat.reshape(N, Cout, HO, WO)


# ----------------------------------------------------------------------------
# UpsampleLayer.forward
# ----------------------------------------------------------------------------
def upsample_layer_forward(x, *, with_conv=False, fir=False, fir_kernel=(1, 3, 3, 1),
                           conv_weight=None, conv_bias=None):
    """Pallas implementation of UpsampleLayer.forward (fir=False paths)."""
    del fir_kernel
    if fir:
        # TODO(synk): FIR paths (upsample_2d / upfirdn2d and fused up-conv Conv2d(up=True))
        # are not implemented as Pallas kernels.
        raise NotImplementedError("fir=True path not implemented")
    if with_conv:
        return upsample_conv3x3_fused(x, conv_weight, conv_bias)
    return upsample_nearest2x(x)


def default_init_weight(key, shape, scale=1.0):
    """DDPM default_init: variance_scaling(scale, 'fan_avg', 'uniform')."""
    c_out, c_in, kh, kw = shape
    fan_in = c_in * kh * kw
    fan_out = c_out * kh * kw
    denom = (fan_in + fan_out) / 2.0
    scale = max(scale, 1e-10)
    limit = math.sqrt(3.0 * scale / denom)
    return jax.random.uniform(key, shape, jnp.float32, -limit, limit)


if __name__ == "__main__":
    key = jax.random.PRNGKey(0)
    kx, kw = jax.random.split(key)

    N, C, H, W = 2, 4, 16, 16
    x = jax.random.normal(kx, (N, C, H, W), jnp.float32)

    # --- Path 1: module defaults (with_conv=False, fir=False): nearest 2x upsample ---
    out = jax.block_until_ready(upsample_layer_forward(x))
    ref = jnp.repeat(jnp.repeat(x, 2, axis=2), 2, axis=3)    # == F.interpolate(..., 'nearest')
    assert out.shape == (N, C, 2 * H, 2 * W)
    assert jnp.allclose(out, ref, atol=1e-6, rtol=1e-6)

    # --- Path 2: with_conv=True (fused nearest upsample + conv3x3, DDPM init, zero bias) ---
    out_ch = C
    weight = default_init_weight(kw, (out_ch, C, 3, 3), scale=1.0)
    bias = jnp.zeros((out_ch,), jnp.float32)
    out2 = jax.block_until_ready(
        upsample_layer_forward(x, with_conv=True, conv_weight=weight, conv_bias=bias)
    )
    ref2 = lax.conv_general_dilated(
        ref, weight, window_strides=(1, 1), padding=((1, 1), (1, 1)),
        dimension_numbers=("NCHW", "OIHW", "NCHW"),
    ) + bias[None, :, None, None]
    assert out2.shape == (N, out_ch, 2 * H, 2 * W)
    assert jnp.allclose(out2, ref2, atol=1e-4, rtol=1e-4)

    print("KERNEL_OK")
</pallas_src>

<mosaic_0001>
module attributes {stable_mosaic.version = 11 : i64} {
  func.func @_upsample2x_kernel(%arg0: i32, %arg1: memref<8x128xf32, #tpu.memory_space<vmem>>, %arg2: memref<128x512xf32, #tpu.memory_space<vmem>>, %arg3: memref<8x512xf32, #tpu.memory_space<vmem>>) attributes {dimension_semantics = [#tpu.dimension_semantics<parallel>], iteration_bounds = array<i64: 2>, scalar_prefetch = 0 : i64, scratch_operands = 0 : i64, tpu.core_type = #tpu.core_type<tc>, window_params = [{transform_indices = @transform_0, window_bounds = array<i64: 8, 128>}, {pipeline_mode = #tpu.pipeline_mode<synchronous>, transform_indices = @transform_1, window_bounds = array<i64: 128, 512>}, {transform_indices = @transform_2, window_bounds = array<i64: 8, 512>}]} {
    %c0 = arith.constant 0 : index
    %c0_0 = arith.constant 0 : index
    %0 = vector.load %arg1[%c0, %c0_0] : memref<8x128xf32, #tpu.memory_space<vmem>>, vector<8x128xf32>
    %c0_1 = arith.constant 0 : index
    %c0_2 = arith.constant 0 : index
    %1 = vector.load %arg2[%c0_1, %c0_2] : memref<128x512xf32, #tpu.memory_space<vmem>>, vector<128x512xf32>
    %cst = arith.constant dense<0.000000e+00> : vector<8x512xf32>
    %2 = tpu.matmul %0, %1, %cst {dimension_numbers = #tpu.dot_dimension_numbers<[1], [0], [0], [1], [0, 0, 1, 1], [], []>} : vector<8x128xf32>, vector<128x512xf32>, vector<8x512xf32> -> vector<8x512xf32>
    %c0_3 = arith.constant 0 : index
    %c0_4 = arith.constant 0 : index
    %3 = vector.load %arg3[%c0_3, %c0_4] : memref<8x512xf32, #tpu.memory_space<vmem>>, vector<8x512xf32>
    tpu.vector_store %arg3[%c0_3, %c0_4], %2 {strides = array<i32>} : memref<8x512xf32, #tpu.memory_space<vmem>>, vector<8x512xf32>,
    return
  }
  func.func @transform_0(%arg0: i32) -> (i32, i32) {
    %c0_i32 = arith.constant 0 : i32
    %c0_i32_0 = arith.constant 0 : i32
    return %arg0, %c0_i32 : i32, i32
  }
  func.func @transform_1(%arg0: i32) -> (i32, i32) {
    %c0_i32 = arith.constant 0 : i32
    %c0_i32_0 = arith.constant 0 : i32
    %c0_i32_1 = arith.constant 0 : i32
    return %c0_i32, %c0_i32_0 : i32, i32
  }
  func.func @transform_2(%arg0: i32) -> (i32, i32) {
    %c0_i32 = arith.constant 0 : i32
    %c0_i32_0 = arith.constant 0 : i32
    return %arg0, %c0_i32 : i32, i32
  }
}

</mosaic_0001>

<llo_original>
// kernel: tpu_custom_call.1
$region0: #{tpu_custom_call.1}
  #allocation0 [shape = 'u32[]', space=smem, size = 0x4, offset = 0x4, fixed_abs, tag = 'smem constant byte address 0x4 - core index']
  #allocation1 [shape = 'u32[144,128]{1,0:T(1,128)}', space=vmem, size = 0x12000, scoped, tag = 'internal scratch']
  %s0 = inlined_call_operand.hbm [shape: f32[16,128], index: 0, kind: input, shape index: {}]
  %s1 = inlined_call_operand.hbm [shape: f32[128,512], index: 1, kind: input, shape index: {}]
  %s2 = inlined_call_operand.hbm [shape: f32[16,512], index: 2, kind: output, shape index: {}]
  %s3 = sld [smem:[#allocation0]]
  $region49: #{tpu_custom_call.1} parent=0
    _
  %s5 = ssub.s32 1, %s3
  %s6 = scalar_select 0, %s5, %s3
  $region1: #{tpu_custom_call.1} parent=0
    #allocation2 [shape = 'u8[8192]{0}', space=vmem, size = 0x2000, scoped, tag = 'input window, operand 0']
    #allocation3 [shape = 's32[2]{0}', space=sflag, size = 0x8, scoped, tag = 'scoped memory for tpu_custom_call.1']
    #allocation4 [shape = 's32[2]{0}', space=sflag, size = 0x8, scoped, tag = 'scoped memory for tpu_custom_call.1']
    #allocation5 [shape = 'u8[262144]{0}', space=vmem, size = 0x40000, scoped, tag = 'input window, operand 1, single buffered']
    #allocation6 [shape = 's32[1]{0}', space=sflag, size = 0x4, scoped, tag = 'scoped memory for tpu_custom_call.1']
    #allocation7 [shape = 'u8[32768]{0}', space=vmem, size = 0x8000, scoped, tag = 'output window, operand 0']
    %7 = vsyncpa [#allocation3], 0
    %s8 = scalar_lea.sflag [#allocation3], 1
    %9 = vsyncpa %s8, 0
    %10 = vsyncpa [#allocation6], 0
    %11 = vsyncpa [#allocation4], 0
    %s12 = scalar_lea.sflag [#allocation4], 1
    %13 = vsyncpa %s12, 0
    loop: start=0, step=1, limit=4
    $region2: #{tpu_custom_call.1} parent=1 // loop_pre_header
      _
    $region3: #{tpu_custom_call.1} parent=1 // loop_header
      %s15 = sphi 0, %s19
      %p16 = scmp.ge.s32.totalorder %s15, 4
      %s25 = sphi 0, %s27
      %s28 = sphi 0, %s25
      %s29 = sphi 0, %s28
      %s45 = sphi 0, %s29
      %s49 = sphi 0, %s49
      %s51 = sphi 0, %s49
      %s52 = sphi 0, %s51
      %s66 = sphi 0, %s52
      %s72 = sphi 0, %s74
      %s75 = sphi 0, %s72
      %s76 = sphi 0, %s75
      %s92 = sphi 0, %s76
    $region4: #{tpu_custom_call.1} parent=1 // loop_header_branch
      %18 = sbr.rel (%p16) target = $region8
    $region5: #{tpu_custom_call.1} parent=1 // loop_body
      %s20 = ssub.s32 %s15, 1
      %s21 = ssub.s32 %s15, 2
      %s22 = sadd.s32 %s15, 1
      %s23 = ssub.s32 %s15, %s22
      %p24 = scmp.eq.s32.totalorder %s23, 0
      %s26 = sadd.s32 %s25, 1
      %s27 = scalar_select %p24, %s25, %s26
      %p30 = pneg %p24
      %p31 = scmp.eq.s32.totalorder %s15, 1
      %p32 = por %p30, %p31
      %p33 = scmp.ne.s32.totalorder %s25, %s28
      %p34 = scmp.eq.s32.totalorder %s15, 0
      %p35 = por %p33, %p34
      %p36 = scmp.ne.s32.totalorder %s25, %s28
      %p37 = scmp.eq.s32.totalorder %s20, 1
      %p38 = por %p36, %p37
      %p39 = scmp.ne.s32.totalorder %s28, %s29
      %p40 = scmp.eq.s32.totalorder %s20, 0
      %p41 = por %p39, %p40
      %p42 = scmp.ne.s32.totalorder %s28, %s29
      %p43 = scmp.eq.s32.totalorder %s21, 1
      %p44 = por %p42, %p43
      %p46 = scmp.ne.s32.totalorder %s29, %s45
      %p47 = scmp.eq.s32.totalorder %s21, 0
      %p48 = por %p46, %p47
      %s50 = sadd.s32 %s49, 1
      %p53 = scmp.eq.s32.totalorder %s15, 1
      %p54 = scmp.ne.s32.totalorder %s49, %s51
      %p55 = scmp.eq.s32.totalorder %s15, 0
      %p56 = por %p54, %p55
      %p57 = scmp.ne.s32.totalorder %s49, %s51
      %p58 = scmp.eq.s32.totalorder %s20, 1
      %p59 = por %p57, %p58
      %p60 = scmp.ne.s32.totalorder %s51, %s52
      %p61 = scmp.eq.s32.totalorder %s20, 0
      %p62 = por %p60, %p61
      %p63 = scmp.ne.s32.totalorder %s51, %s52
      %p64 = scmp.eq.s32.totalorder %s21, 1
      %p65 = por %p63, %p64
      %p67 = scmp.ne.s32.totalorder %s52, %s66
      %p68 = scmp.eq.s32.totalorder %s21, 0
      %p69 = por %p67, %p68
      %s70 = ssub.s32 %s15, %s22
      %p71 = scmp.eq.s32.totalorder %s70, 0
      %s73 = sadd.s32 %s72, 1
      %s74 = scalar_select %p71, %s72, %s73
      %p77 = pneg %p71
      %p78 = scmp.eq.s32.totalorder %s15, 1
      %p79 = por %p77, %p78
      %p80 = scmp.ne.s32.totalorder %s72, %s75
      %p81 = scmp.eq.s32.totalorder %s15, 0
      %p82 = por %p80, %p81
      %p83 = scmp.ne.s32.totalorder %s72, %s75
      %p84 = scmp.eq.s32.totalorder %s20, 1
      %p85 = por %p83, %p84
      %p86 = scmp.ne.s32.totalorder %s75, %s76
      %p87 = scmp.eq.s32.totalorder %s20, 0
      %p88 = por %p86, %p87
      %p89 = scmp.ne.s32.totalorder %s75, %s76
      %p90 = scmp.eq.s32.totalorder %s21, 1
      %p91 = por %p89, %p90
      %p93 = scmp.ne.s32.totalorder %s76, %s92
      %p94 = scmp.eq.s32.totalorder %s21, 0
      %p95 = por %p93, %p94
      %p96 = scmp.le.s32.totalorder 1, %s15
      %p97 = scmp.lt.s32.totalorder %s15, 3
      %p98 = pnand %p96, %p97
      %p99 = pneg %p98
      // Predicated region
      $region9: #{tpu_custom_call.1} parent=5 // pred_check
        _
      $region10: #{tpu_custom_call.1} parent=5 // pred_check_branch
        %101 = sbr.rel (%p98) target = $region12
      $region11: #{tpu_custom_call.1} parent=5 // pred_region
        %s102 = ssub.s32 %s15, 1
        // Predicated region
        $region13: #{tpu_custom_call.1} parent=11 // pred_check
          %p103 = pneg %p62
        $region14: #{tpu_custom_call.1} parent=11 // pred_check_branch
          %105 = sbr.rel (%p103) target = $region16
        $region15: #{tpu_custom_call.1} parent=11 // pred_region
          %s107 = ssub.s32 8192, 8192
          %108 = vsyncadd [#allocation6], %s107
          %s109 = sshll.u32 [#allocation5], 4
          %s110 = int_to_ptr.vmem [resolvable:$true] %s109
          %115 = dma.hbm_to_vmem [thread:$0]  %s1, 8192, %s110, [#allocation6], 512, 512, 32
        $region16: #{tpu_custom_call.1} parent=11 // pred_fallthru
          _
      $region12: #{tpu_custom_call.1} parent=5 // pred_fallthru
        _
      %p116 = scmp.lt.s32.totalorder %s15, 2
      // Predicated region
      $region17: #{tpu_custom_call.1} parent=5 // pred_check
        %p117 = pneg %p116
      $region18: #{tpu_custom_call.1} parent=5 // pred_check_branch
        %119 = sbr.rel (%p117) target = $region20
      $region19: #{tpu_custom_call.1} parent=5 // pred_region
        // Predicated region
        $region21: #{tpu_custom_call.1} parent=19 // pred_check
          %p120 = pneg %p35
        $region22: #{tpu_custom_call.1} parent=19 // pred_check_branch
          %122 = sbr.rel (%p120) target = $region24
        $region23: #{tpu_custom_call.1} parent=19 // pred_region
          %s123 = sand.u32 %s25, 1
          %s124 = scalar_lea.sflag [#allocation3], %s123
          %s125 = sand.u32 %s25, 1
          %s126 = smul.addr %s125, 8
          %s127 = scalar_lea.vmem [#allocation2], %s126
          %s129 = ssub.s32 128, 128
          %130 = vsyncadd %s124, %s129
          %s131 = smul.addr %s15, 128
          %s132 = scalar_lea.hbm %s0, %s131
          %s134 = sshll.u32 %s127, 4
          %s135 = int_to_ptr.vmem [resolvable:$true] %s134
          %137 = dma.hbm_to_vmem [thread:$0]  %s132, 128, %s135, %s124
        $region24: #{tpu_custom_call.1} parent=19 // pred_fallthru
          _
      $region20: #{tpu_custom_call.1} parent=5 // pred_fallthru
        _
      %p138 = scmp.le.s32.totalorder 1, %s15
      %p139 = scmp.lt.s32.totalorder %s15, 3
      %p140 = pnand %p138, %p139
      %p141 = pneg %p140
      // Predicated region
      $region25: #{tpu_custom_call.1} parent=5 // pred_check
        _
      $region26: #{tpu_custom_call.1} parent=5 // pred_check_branch
        %143 = sbr.rel (%p140) target = $region28
      $region27: #{tpu_custom_call.1} parent=5 // pred_region
        %s144 = ssub.s32 %s15, 1
        %s145 = sand.u32 %s28, 1
        %s146 = scalar_lea.sflag [#allocation3], %s145
        %s147 = sand.u32 %s28, 1
        %s148 = smul.addr %s147, 8
        %s149 = scalar_lea.vmem [#allocation2], %s148
        // Predicated region
        $region29: #{tpu_custom_call.1} parent=27 // pred_check
          %p150 = pneg %p41
        $region30: #{tpu_custom_call.1} parent=27 // pred_check_branch
          %152 = sbr.rel (%p150) target = $region32
        $region31: #{tpu_custom_call.1} parent=27 // pred_region
          %153 = dma.done %s146, 128
        $region32: #{tpu_custom_call.1} parent=27 // pred_fallthru
          _
        // Predicated region
        $region33: #{tpu_custom_call.1} parent=27 // pred_check
          %p154 = pneg %p62
        $region34: #{tpu_custom_call.1} parent=27 // pred_check_branch
          %156 = sbr.rel (%p154) target = $region36
        $region35: #{tpu_custom_call.1} parent=27 // pred_region
          %157 = dma.done [#allocation6], 8192
        $region36: #{tpu_custom_call.1} parent=27 // pred_fallthru
          _
        %s158 = sand.u32 %s28, 1
        %s159 = scalar_lea.sflag [#allocation3], %s158
        %s160 = sand.u32 %s28, 1
        %s161 = smul.addr %s160, 8
        %s162 = scalar_lea.vmem [#allocation2], %s161
        %p163 = pneg %p41
        %p164 = pneg %p38
        %p165 = pneg %p62
        %p166 = pneg %p59
        %p167 = pneg %p88
        %p168 = pneg %p85
        %s169 = sand.u32 %s75, 1
        %s170 = scalar_lea.sflag [#allocation4], %s169
        %s171 = sand.u32 %s75, 1
        %s172 = smul.addr %s171, 32
        %s173 = scalar_lea.vmem [#allocation7], %s172
        %v174 = vld [vmem:[%s149] sm:$0xff]
        %v175 = vld [vmem:[#allocation5] sm:$0xff]
        %v176 = vld [vmem:[#allocation5 + $0x8] sm:$0xff]
        %v177 = vld [vmem:[#allocation5 + $0x10] sm:$0xff]
        %v178 = vld [vmem:[#allocation5 + $0x18] sm:$0xff]
        %v179 = vld [vmem:[#allocation5 + $0x20] sm:$0xff]
        %v180 = vld [vmem:[#allocation5 + $0x28] sm:$0xff]
        %v181 = vld [vmem:[#allocation5 + $0x30] sm:$0xff]
        %v182 = vld [vmem:[#allocation5 + $0x38] sm:$0xff]
        %v183 = vld [vmem:[#allocation5 + $0x40] sm:$0xff]
        %v184 = vld [vmem:[#allocation5 + $0x48] sm:$0xff]
        %v185 = vld [vmem:[#allocation5 + $0x50] sm:$0xff]
        %v186 = vld [vmem:[#allocation5 + $0x58] sm:$0xff]
        %v187 = vld [vmem:[#allocation5 + $0x60] sm:$0xff]
        %v188 = vld [vmem:[#allocation5 + $0x68] sm:$0xff]
        %v189 = vld [vmem:[#allocation5 + $0x70] sm:$0xff]
        %v190 = vld [vmem:[#allocation5 + $0x78] sm:$0xff]
        %v191 = vld [vmem:[#allocation5 + $0x80] sm:$0xff]
        %v192 = vld [vmem:[#allocation5 + $0x88] sm:$0xff]
        %v193 = vld [vmem:[#allocation5 + $0x90] sm:$0xff]
        %v194 = vld [vmem:[#allocation5 + $0x98] sm:$0xff]
        %v195 = vld [vmem:[#allocation5 + $0xa0] sm:$0xff]
        %v196 = vld [vmem:[#allocation5 + $0xa8] sm:$0xff]
        %v197 = vld [vmem:[#allocation5 + $0xb0] sm:$0xff]
        %v198 = vld [vmem:[#allocation5 + $0xb8] sm:$0xff]
        %v199 = vld [vmem:[#allocation5 + $0xc0] sm:$0xff]
        %v200 = vld [vmem:[#allocation5 + $0xc8] sm:$0xff]
        %v201 = vld [vmem:[#allocation5 + $0xd0] sm:$0xff]
        %v202 = vld [vmem:[#allocation5 + $0xd8] sm:$0xff]
        %v203 = vld [vmem:[#allocation5 + $0xe0] sm:$0xff]
        %v204 = vld [vmem:[#allocation5 + $0xe8] sm:$0xff]
        %v205 = vld [vmem:[#allocation5 + $0xf0] sm:$0xff]
        %v206 = vld [vmem:[#allocation5 + $0xf8] sm:$0xff]
        %v207 = vld [vmem:[#allocation5 + $0x100] sm:$0xff]
        %v208 = vld [vmem:[#allocation5 + $0x108] sm:$0xff]
        %v209 = vld [vmem:[#allocation5 + $0x110] sm:$0xff]
        %v210 = vld [vmem:[#allocation5 + $0x118] sm:$0xff]
        %v211 = vld [vmem:[#allocation5 + $0x120] sm:$0xff]
        %v212 = vld [vmem:[#allocation5 + $0x128] sm:$0xff]
        %v213 = vld [vmem:[#allocation5 + $0x130] sm:$0xff]
        %v214 = vld [vmem:[#allocation5 + $0x138] sm:$0xff]
        %v215 = vld [vmem:[#allocation5 + $0x140] sm:$0xff]
        %v216 = vld [vmem:[#allocation5 + $0x148] sm:$0xff]
        %v217 = vld [vmem:[#allocation5 + $0x150] sm:$0xff]
        %v218 = vld [vmem:[#allocation5 + $0x158] sm:$0xff]
        %v219 = vld [vmem:[#allocation5 + $0x160] sm:$0xff]
        %v220 = vld [vmem:[#allocation5 + $0x168] sm:$0xff]
        %v221 = vld [vmem:[#allocation5 + $0x170] sm:$0xff]
        %v222 = vld [vmem:[#allocation5 + $0x178] sm:$0xff]
        %v223 = vld [vmem:[#allocation5 + $0x180] sm:$0xff]
        %v224 = vld [vmem:[#allocation5 + $0x188] sm:$0xff]
        %v225 = vld [vmem:[#allocation5 + $0x190] sm:$0xff]
        %v226 = vld [vmem:[#allocation5 + $0x198] sm:$0xff]
        %v227 = vld [vmem:[#allocation5 + $0x1a0] sm:$0xff]
        %v228 = vld [vmem:[#allocation5 + $0x1a8] sm:$0xff]
        %v229 = vld [vmem:[#allocation5 + $0x1b0] sm:$0xff]
        %v230 = vld [vmem:[#allocation5 + $0x1b8] sm:$0xff]
        %v231 = vld [vmem:[#allocation5 + $0x1c0] sm:$0xff]
        %v232 = vld [vmem:[#allocation5 + $0x1c8] sm:$0xff]
        %v233 = vld [vmem:[#allocation5 + $0x1d0] sm:$0xff]
        %v234 = vld [vmem:[#allocation5 + $0x1d8] sm:$0xff]
        %v235 = vld [vmem:[#allocation5 + $0x1e0] sm:$0xff]
        %v236 = vld [vmem:[#allocation5 + $0x1e8] sm:$0xff]
        %v237 = vld [vmem:[#allocation5 + $0x1f0] sm:$0xff]
        %v238 = vld [vmem:[#allocation5 + $0x1f8] sm:$0xff]
        %239 = vmatprep.subr.mxu0 %v176
        %240 = vmatpush1.msra.mxu0 %v175
        %241 = vmatprep.subr.mxu0 %v180
        %242 = vmatpush1.msra.mxu0 %v179
        %243 = vmatprep.subr.mxu0 %v184
        %244 = vmatpush1.msra.mxu0 %v183
        %245 = vmatprep.subr.mxu0 %v188
        %246 = vmatpush1.msra.mxu0 %v187
        %247 = vmatprep.subr.mxu0 %v192
        %248 = vmatpush1.msra.mxu0 %v191
        %249 = vmatprep.subr.mxu0 %v196
        %250 = vmatpush1.msra.mxu0 %v195
        %251 = vmatprep.subr.mxu0 %v200
        %252 = vmatpush1.msra.mxu0 %v199
        %253 = vmatprep.subr.mxu0 %v204
        %254 = vmatpush1.msra.mxu0 %v203
        %255 = vmatprep.subr.mxu0 %v208
        %256 = vmatpush1.msra.mxu0 %v207
        %257 = vmatprep.subr.mxu0 %v212
        %258 = vmatpush1.msra.mxu0 %v211
        %259 = vmatprep.subr.mxu0 %v216
        %260 = vmatpush1.msra.mxu0 %v215
        %261 = vmatprep.subr.mxu0 %v220
        %262 = vmatpush1.msra.mxu0 %v219
        %263 = vmatprep.subr.mxu0 %v224
        %264 = vmatpush1.msra.mxu0 %v223
        %265 = vmatprep.subr.mxu0 %v228
        %266 = vmatpush1.msra.mxu0 %v227
        %267 = vmatprep.subr.mxu0 %v232
        %268 = vmatpush1.msra.mxu0 %v231
        %269 = vmatprep.subr.mxu0 %v236
        %270 = vmatpush1.msra.mxu0 %v235
        %271 = vmatprep.subr.mxu0 0.0
        %272 = vmatpush1.msra.mxu0 0.0
        %273 = vmatprep.subr.mxu0 0.0
        %274 = vmatpush1.msra.mxu0 0.0
        %275 = vmatprep.subr.mxu0 0.0
        %276 = vmatpush1.msra.mxu0 0.0
        %277 = vmatprep.subr.mxu0 0.0
        %278 = vmatpush1.msra.mxu0 0.0
        %279 = vmatprep.subr.mxu0 0.0
        %280 = vmatpush1.msra.mxu0 0.0
        %281 = vmatprep.subr.mxu0 0.0
        %282 = vmatpush1.msra.mxu0 0.0
        %283 = vmatprep.subr.mxu0 0.0
        %284 = vmatpush1.msra.mxu0 0.0
        %285 = vmatprep.subr.mxu0 0.0
        %286 = vmatpush1.msra.mxu0 0.0
        %287 = vmatprep.subr.mxu0 0.0
        %288 = vmatpush1.msra.mxu0 0.0
        %289 = vmatprep.subr.mxu0 0.0
        %290 = vmatpush1.msra.mxu0 0.0
        %291 = vmatprep.subr.mxu0 0.0
        %292 = vmatpush1.msra.mxu0 0.0
        %293 = vmatprep.subr.mxu0 0.0
        %294 = vmatpush1.msra.mxu0 0.0
        %295 = vmatprep.subr.mxu0 0.0
        %296 = vmatpush1.msra.mxu0 0.0
        %297 = vmatprep.subr.mxu0 0.0
        %298 = vmatpush1.msra.mxu0 0.0
        %299 = vmatprep.subr.mxu0 0.0
        %300 = vmatpush1.msra.mxu0 0.0
        %301 = vmatprep.subr.mxu0 0.0
        %302 = vmatpush1.msra.mxu0 0.0
        %303 = vmatprep.mubr.f32.mxu0 0.0
        %304 = vmatmul.mubr.f32.gmra.mrb[0].mxu0 %v174
        %v305 = vpop.f32.mrb[0].mxu0
        %v306 = vadd.f32 0.0, %v305
        %v307 = vpop.f32.mrb[0].mxu0
        %v308 = vadd.f32 0.0, %v307
        %309 = vdwg.mxu0
        %310 = vmatprep.subr.mxu0 %v178
        %311 = vmatpush1.msra.mxu0 %v177
        %312 = vmatprep.subr.mxu0 %v182
        %313 = vmatpush1.msra.mxu0 %v181
        %314 = vmatprep.subr.mxu0 %v186
        %315 = vmatpush1.msra.mxu0 %v185
        %316 = vmatprep.subr.mxu0 %v190
        %317 = vmatpush1.msra.mxu0 %v189
        %318 = vmatprep.subr.mxu0 %v194
        %319 = vmatpush1.msra.mxu0 %v193
        %320 = vmatprep.subr.mxu0 %v198
        %321 = vmatpush1.msra.mxu0 %v197
        %322 = vmatprep.subr.mxu0 %v202
        %323 = vmatpush1.msra.mxu0 %v201
        %324 = vmatprep.subr.mxu0 %v206
        %325 = vmatpush1.msra.mxu0 %v205
        %326 = vmatprep.subr.mxu0 %v210
        %327 = vmatpush1.msra.mxu0 %v209
        %328 = vmatprep.subr.mxu0 %v214
        %329 = vmatpush1.msra.mxu0 %v213
        %330 = vmatprep.subr.mxu0 %v218
        %331 = vmatpush1.msra.mxu0 %v217
        %332 = vmatprep.subr.mxu0 %v222
        %333 = vmatpush1.msra.mxu0 %v221
        %334 = vmatprep.subr.mxu0 %v226
        %335 = vmatpush1.msra.mxu0 %v225
        %336 = vmatprep.subr.mxu0 %v230
        %337 = vmatpush1.msra.mxu0 %v229
        %338 = vmatprep.subr.mxu0 %v234
        %339 = vmatpush1.msra.mxu0 %v233
        %340 = vmatprep.subr.mxu0 %v238
        %341 = vmatpush1.msra.mxu0 %v237
        %342 = vmatprep.subr.mxu0 0.0
        %343 = vmatpush1.msra.mxu0 0.0
        %344 = vmatprep.subr.mxu0 0.0
        %345 = vmatpush1.msra.mxu0 0.0
        %346 = vmatprep.subr.mxu0 0.0
        %347 = vmatpush1.msra.mxu0 0.0
        %348 = vmatprep.subr.mxu0 0.0
        %349 = vmatpush1.msra.mxu0 0.0
        %350 = vmatprep.subr.mxu0 0.0
        %351 = vmatpush1.msra.mxu0 0.0
        %352 = vmatprep.subr.mxu0 0.0
        %353 = vmatpush1.msra.mxu0 0.0
        %354 = vmatprep.subr.mxu0 0.0
        %355 = vmatpush1.msra.mxu0 0.0
        %356 = vmatprep.subr.mxu0 0.0
        %357 = vmatpush1.msra.mxu0 0.0
        %358 = vmatprep.subr.mxu0 0.0
        %359 = vmatpush1.msra.mxu0 0.0
        %360 = vmatprep.subr.mxu0 0.0
        %361 = vmatpush1.msra.mxu0 0.0
        %362 = vmatprep.subr.mxu0 0.0
        %363 = vmatpush1.msra.mxu0 0.0
        %364 = vmatprep.subr.mxu0 0.0
        %365 = vmatpush1.msra.mxu0 0.0
        %366 = vmatprep.subr.mxu0 0.0
        %367 = vmatpush1.msra.mxu0 0.0
        %368 = vmatprep.subr.mxu0 0.0
        %369 = vmatpush1.msra.mxu0 0.0
        %370 = vmatprep.subr.mxu0 0.0
        %371 = vmatpush1.msra.mxu0 0.0
        %372 = vmatprep.subr.mxu0 0.0
        %373 = vmatpush1.msra.mxu0 0.0
        %374 = vmatprep.mubr.f32.mxu0 0.0
        %375 = vmatmul.mubr.f32.gmra.mrb[0].mxu0 %v174
        %v376 = vpop.f32.mrb[0].mxu0
        %v377 = vadd.f32 0.0, %v376
        %v378 = vpop.f32.mrb[0].mxu0
        %v379 = vadd.f32 0.0, %v378
        %380 = vdwg.mxu0
        %381 = vst [vmem:[%s173] sm:$0xff] %v306
        %382 = vst [vmem:[%s173 + $0x8] sm:$0xff] %v308
        %383 = vst [vmem:[%s173 + $0x10] sm:$0xff] %v377
        %384 = vst [vmem:[%s173 + $0x18] sm:$0xff] %v379
        %s385 = sand.u32 %s75, 1
        %s386 = scalar_lea.sflag [#allocation4], %s385
        %s387 = sand.u32 %s75, 1
        %s388 = smul.addr %s387, 32
        %s389 = scalar_lea.vmem [#allocation7], %s388
        // Predicated region
        $region37: #{tpu_custom_call.1} parent=27 // pred_check
          %p390 = pneg %p85
        $region38: #{tpu_custom_call.1} parent=27 // pred_check_branch
          %392 = sbr.rel (%p390) target = $region40
        $region39: #{tpu_custom_call.1} parent=27 // pred_region
          %s394 = ssub.s32 512, 512
          %395 = vsyncadd %s386, %s394
          %s396 = smul.addr %s20, 4
          %s397 = smul.addr %s396, 128
          %s398 = scalar_lea.hbm %s2, %s397
          %s400 = sshll.u32 %s389, 4
          %s401 = int_to_ptr.vmem [resolvable:$true] %s400
          %403 = dma.vmem_to_hbm [thread:$0]  %s401, 512, %s398, %s386
        $region40: #{tpu_custom_call.1} parent=27 // pred_fallthru
          _
      $region28: #{tpu_custom_call.1} parent=5 // pred_fallthru
        _
      %p404 = scmp.le.s32.totalorder 2, %s15
      // Predicated region
      $region41: #{tpu_custom_call.1} parent=5 // pred_check
        %p405 = pneg %p404
      $region42: #{tpu_custom_call.1} parent=5 // pred_check_branch
        %407 = sbr.rel (%p405) target = $region44
      $region43: #{tpu_custom_call.1} parent=5 // pred_region
        %s408 = ssub.s32 %s15, 2
        // Predicated region
        $region45: #{tpu_custom_call.1} parent=43 // pred_check
          %p409 = pneg %p91
        $region46: #{tpu_custom_call.1} parent=43 // pred_check_branch
          %411 = sbr.rel (%p409) target = $region48
        $region47: #{tpu_custom_call.1} parent=43 // pred_region
          %s412 = sand.u32 %s76, 1
          %s413 = scalar_lea.sflag [#allocation4], %s412
          %s414 = sand.u32 %s76, 1
          %s415 = smul.addr %s414, 32
          %s416 = scalar_lea.vmem [#allocation7], %s415
          %417 = dma.done %s413, 512
        $region48: #{tpu_custom_call.1} parent=43 // pred_fallthru
          _
      $region44: #{tpu_custom_call.1} parent=5 // pred_fallthru
        _
    $region6: #{tpu_custom_call.1} parent=1 // loop_footer
      %s19 = sadd.s32 1, %s15
    $region7: #{tpu_custom_call.1} parent=1 // loop_footer_branch
      %14 = sbr.rel target = $region3
    $region8: #{tpu_custom_call.1} parent=1 // loop_exit
      _
    %418 = vsyncpa [#allocation3], 1
    %s419 = scalar_lea.sflag [#allocation3], 1
    %420 = vsyncpa %s419, 1
    %421 = vsyncpa [#allocation6], 1
    %422 = vsyncpa [#allocation4], 1
    %s423 = scalar_lea.sflag [#allocation4], 1
    %424 = vsyncpa %s423, 1

</llo_original>
